<compile_context>
chip_gen: v5e
topology: v5e:2x2
jax: 0.10.0
libtpu: 0.0.40
codegen_flags: <defaults>
</compile_context>

<pallas_src>
import math

import jax
import jax.numpy as jnp
from jax.experimental import pallas as pl
from jax.experimental.pallas import tpu as pltpu


def _round_up(a, m):
    return -(-a // m) * m


def _gnn_encoder_kernel(adj_ref, x_ref, w1_ref, b1_ref, w2_ref, b2_ref,
                        o_ref, acc_ref):
    # grid = (row_tiles, src_tiles); axis 1 (k) is the reduction over source nodes.
    k = pl.program_id(1)

    @pl.when(k == 0)
    def _init():
        acc_ref[...] = jnp.zeros_like(acc_ref)

    # fc1 + relu on this source-node tile (cheap vs. aggregation; recomputed per row
    # tile so the hidden activations never leave VMEM).  f32 accumulate, then cast to
    # the streaming dtype for the bf16 MXU path.
    h = jnp.dot(x_ref[...], w1_ref[...],
                preferred_element_type=jnp.float32) + b1_ref[...]
    h = jnp.maximum(h, 0.0).astype(adj_ref.dtype)

    # Fused aggregation: adj_ref already holds 0.5*(adj_out + adj_in), so the two
    # original matmuls collapse into a single MXU pass; f32 accumulation in VMEM.
    acc_ref[...] += jnp.dot(adj_ref[...], h,
                            preferred_element_type=jnp.float32)

    @pl.when(k == pl.num_programs(1) - 1)
    def _finalize():
        y = jnp.dot(acc_ref[...].astype(w2_ref.dtype), w2_ref[...],
                    preferred_element_type=jnp.float32) + b2_ref[...]
        o_ref[...] = jnp.maximum(y, 0.0).astype(o_ref.dtype)


def gnn_encoder_forward(x, adj_out, adj_in, w1, b1, w2, b2, *,
                        compute_dtype=jnp.bfloat16,
                        single_block_max_nodes=1024,
                        row_tile=None, k_tile=None,
                        vmem_cap_bytes=24 * 1024 * 1024,
                        xla_fallback_max_nodes=0):
    """GNNEncoder forward: relu(fc1) -> (adj_out@h + adj_in@h)/2 -> relu(fc2).

    w1: (C_in, H), w2: (H, H) (pre-transposed from torch Linear), b1/b2: (1, H).
    compute_dtype is the MXU streaming dtype (bf16 default; f32 for exactness).
    """
    n, c_in = x.shape
    hid = w1.shape[1]
    out_dtype = x.dtype

    if n <= xla_fallback_max_nodes:
        # Tiny graphs: launch + padding dominate; plain XLA is faster (opt-in).
        h = jax.nn.relu(x @ w1 + b1)
        agg = (adj_out @ h + adj_in @ h) * 0.5
        return jax.nn.relu(agg @ w2 + b2).astype(out_dtype)

    compute_dtype = jnp.dtype(compute_dtype)
    itemsize = compute_dtype.itemsize
    out_itemsize = jnp.dtype(out_dtype).itemsize
    sub = 8 * max(1, 4 // itemsize)          # sublane tile: 8 (f32), 16 (bf16)

    # Lane-dense hidden width (multiple of 128) -> unmasked stores, full MXU lanes.
    h_pad = _round_up(hid, 128)

    # ---- tile selection -----------------------------------------------------
    if row_tile is not None or k_tile is not None:
        tm = int(row_tile or 256)
        tk = int(k_tile or 256)
        n_pad = _round_up(n, math.lcm(tm, tk))
    elif n <= single_block_max_nodes:
        # Single full block: minimal padding, (1,1) grid.
        n_pad = _round_up(n, sub)
        tm = tk = n_pad
    else:
        # Large graphs: 512 output rows, deep reduction tile (amortizes per-step
        # overhead and the fc1 recompute / accumulator read-modify-write).
        tm = 512
        n_pad = _round_up(n, tm)
        tk = 1024 if (itemsize <= 2 and n_pad % 1024 == 0) else 512

    def _vmem_need(tm_, tk_):
        return (2 * tm_ * tk_ * itemsize          # adj tile (double-buffered)
                + 2 * tk_ * c_in * itemsize       # x source tile
                + 2 * c_in * h_pad * itemsize     # w1 (resident; default dbl-buf)
                + 2 * h_pad * h_pad * itemsize    # w2 (resident; default dbl-buf)
                + 4 * h_pad * 4                   # b1 + b2 (f32)
                + tm_ * h_pad * 4                 # f32 accumulator scratch
                + 2 * tm_ * h_pad * out_itemsize)  # output tile

    # Explicit VMEM budget (v7x has 64 MiB physical / ~32 MiB scoped): shrink the
    # reduction depth first, then the row tile, until the working set fits.
    while (_vmem_need(tm, tk) > vmem_cap_bytes and tk >= 2 * sub
           and n_pad % (tk // 2) == 0):
        tk //= 2
    while (_vmem_need(tm, tk) > vmem_cap_bytes and tm >= 2 * sub
           and n_pad % (tm // 2) == 0):
        tm //= 2

    grid = (n_pad // tm, n_pad // tk)
    vmem_limit = int(min(max(2 * _vmem_need(tm, tk), 16 << 20), 32 << 20))

    # ---- fold + cast + pad in one fusible pass ------------------------------
    pn = n_pad - n
    ph = h_pad - hid
    adj_fold = ((adj_out + adj_in) * 0.5).astype(compute_dtype)
    adj_p = jnp.pad(adj_fold, ((0, pn), (0, pn)))
    x_p = jnp.pad(x.astype(compute_dtype), ((0, pn), (0, 0)))
    w1_p = jnp.pad(w1.astype(compute_dtype), ((0, 0), (0, ph)))
    w2_p = jnp.pad(w2.astype(compute_dtype), ((0, ph), (0, ph)))
    b1_p = jnp.pad(b1.astype(jnp.float32).reshape(1, hid), ((0, 0), (0, ph)))
    b2_p = jnp.pad(b2.astype(jnp.float32).reshape(1, hid), ((0, 0), (0, ph)))

    cost = pl.CostEstimate(
        flops=(2 * n_pad * n_pad * h_pad                 # aggregation
               + 2 * grid[0] * n_pad * c_in * h_pad      # fc1 (per row tile)
               + 2 * n_pad * h_pad * h_pad),             # fc2
        transcendentals=0,
        bytes_accessed=((adj_p.size + x_p.size + w1_p.size + w2_p.size) * itemsize
                        + (b1_p.size + b2_p.size) * 4
                        + n_pad * h_pad * out_itemsize),
    )

    # NOTE: w1/b1/w2/b2 have constant index_maps (fetched once); at larger hidden
    # widths mark them pipeline_mode=pl.Buffered(1) to reclaim the second buffer.
    out_padded = pl.pallas_call(
        _gnn_encoder_kernel,
        out_shape=jax.ShapeDtypeStruct((n_pad, h_pad), out_dtype),
        grid_spec=pltpu.PrefetchScalarGridSpec(
            num_scalar_prefetch=0,
            grid=grid,
            in_specs=[
                pl.BlockSpec((tm, tk), lambda i, k: (i, k)),        # folded adjacency
                pl.BlockSpec((tk, c_in), lambda i, k: (k, 0)),      # x source tile
                pl.BlockSpec((c_in, h_pad), lambda i, k: (0, 0)),   # w1 (resident)
                pl.BlockSpec((1, h_pad), lambda i, k: (0, 0)),      # b1
                pl.BlockSpec((h_pad, h_pad), lambda i, k: (0, 0)),  # w2 (resident)
                pl.BlockSpec((1, h_pad), lambda i, k: (0, 0)),      # b2
            ],
            out_specs=pl.BlockSpec((tm, h_pad), lambda i, k: (i, 0)),
            scratch_shapes=[pltpu.VMEM((tm, h_pad), jnp.float32)],
        ),
        compiler_params=pltpu.CompilerParams(
            dimension_semantics=("parallel", "arbitrary"),
            vmem_limit_bytes=vmem_limit),
        cost_estimate=cost,
    )(adj_p, x_p, w1_p, b1_p, w2_p, b2_p)

    return out_padded[:n, :hid]


def _reference(x, adj_out, adj_in, w1, b1, w2, b2):
    h = jax.nn.relu(x @ w1 + b1)
    agg = (adj_out @ h + adj_in @ h) / 2.0
    return jax.nn.relu(agg @ w2 + b2)


if __name__ == "__main__":
    def make_case(key, n, c_in, hid):
        kx, ko, ki, kw1, kb1, kw2, kb2 = jax.random.split(key, 7)
        x = jax.random.normal(kx, (n, c_in), dtype=jnp.float32)
        adj_out = jax.random.uniform(ko, (n, n), dtype=jnp.float32)
        adj_in = jax.random.uniform(ki, (n, n), dtype=jnp.float32)
        # Parameters match nn.Linear(c_in, hid) / nn.Linear(hid, hid), stored
        # pre-transposed to (in, out).
        w1 = jax.random.normal(kw1, (c_in, hid), dtype=jnp.float32) * 0.1
        b1 = jax.random.normal(kb1, (1, hid), dtype=jnp.float32) * 0.1
        w2 = jax.random.normal(kw2, (hid, hid), dtype=jnp.float32) * 0.1
        b2 = jax.random.normal(kb2, (1, hid), dtype=jnp.float32) * 0.1
        return x, adj_out, adj_in, w1, b1, w2, b2

    def check(out, ref, n, hid, rel_tol):
        assert out.shape == (n, hid), out.shape
        err = float(jnp.max(jnp.abs(out.astype(jnp.float32) - ref)))
        scale = float(jnp.max(jnp.abs(ref))) + 1e-6
        assert err <= rel_tol * scale + 1e-4, f"err={err} scale={scale}"

    key = jax.random.PRNGKey(0)
    k1, k2 = jax.random.split(key)

    # Case 1: tiny graph (N=16, C_in=8, H=32), exact f32 path, single-block grid.
    args1 = make_case(k1, 16, 8, 32)
    ref1 = _reference(*args1)
    out1 = jax.block_until_ready(
        gnn_encoder_forward(*args1, compute_dtype=jnp.float32))
    check(out1, ref1, 16, 32, rel_tol=2e-5)

    # Case 2: N=384 — default bf16 adjacency stream, single-block grid.
    args2 = make_case(k2, 384, 8, 32)
    ref2 = _reference(*args2)
    out2 = jax.block_until_ready(gnn_encoder_forward(*args2))
    check(out2, ref2, 384, 32, rel_tol=3e-2)

    # Case 3: same graph, forced (3, 3) tiled grid to exercise the pipelined
    # row/reduction path with the f32 accumulator across k steps.
    out3 = jax.block_until_ready(
        gnn_encoder_forward(*args2, row_tile=128, k_tile=128))
    check(out3, ref2, 384, 32, rel_tol=3e-2)

    print("KERNEL_OK")
</pallas_src>

<mosaic_0001>
module attributes {stable_mosaic.version = 11 : i64} {
  func.func @_gnn_encoder_kernel(%arg0: i32, %arg1: i32, %arg2: memref<16x16xf32, #tpu.memory_space<vmem>>, %arg3: memref<16x8xf32, #tpu.memory_space<vmem>>, %arg4: memref<8x128xf32, #tpu.memory_space<vmem>>, %arg5: memref<1x128xf32, #tpu.memory_space<vmem>>, %arg6: memref<128x128xf32, #tpu.memory_space<vmem>>, %arg7: memref<1x128xf32, #tpu.memory_space<vmem>>, %arg8: memref<16x128xf32, #tpu.memory_space<vmem>>, %arg9: memref<16x128xf32, #tpu.memory_space<vmem>>) attributes {dimension_semantics = [#tpu.dimension_semantics<parallel>, #tpu.dimension_semantics<arbitrary>], iteration_bounds = array<i64: 1, 1>, scalar_prefetch = 0 : i64, scratch_operands = 1 : i64, tpu.core_type = #tpu.core_type<tc>, window_params = [{transform_indices = @transform_0, window_bounds = array<i64: 16, 16>}, {transform_indices = @transform_1, window_bounds = array<i64: 16, 8>}, {pipeline_mode = #tpu.pipeline_mode<synchronous>, transform_indices = @transform_2, window_bounds = array<i64: 8, 128>}, {pipeline_mode = #tpu.pipeline_mode<synchronous>, transform_indices = @transform_3, window_bounds = array<i64: 1, 128>}, {pipeline_mode = #tpu.pipeline_mode<synchronous>, transform_indices = @transform_4, window_bounds = array<i64: 128, 128>}, {pipeline_mode = #tpu.pipeline_mode<synchronous>, transform_indices = @transform_5, window_bounds = array<i64: 1, 128>}, {transform_indices = @transform_6, window_bounds = array<i64: 16, 128>}]} {
    %c0_i32 = arith.constant 0 : i32
    %0 = arith.cmpi eq, %arg1, %c0_i32 : i32
    %1 = arith.extui %0 : i1 to i32
    %c0_i32_0 = arith.constant 0 : i32
    %2 = arith.cmpi ne, %1, %c0_i32_0 : i32
    scf.if %2 {
      %cst_16 = arith.constant 0.000000e+00 : f32
      %19 = vector.broadcast %cst_16 : f32 to vector<16x128xf32>
      %c0_17 = arith.constant 0 : index
      %c0_18 = arith.constant 0 : index
      %20 = vector.load %arg9[%c0_17, %c0_18] : memref<16x128xf32, #tpu.memory_space<vmem>>, vector<16x128xf32>
      tpu.vector_store %arg9[%c0_17, %c0_18], %19 {strides = array<i32>} : memref<16x128xf32, #tpu.memory_space<vmem>>, vector<16x128xf32>,
    } else {
    }
    %c0 = arith.constant 0 : index
    %c0_1 = arith.constant 0 : index
    %3 = vector.load %arg3[%c0, %c0_1] : memref<16x8xf32, #tpu.memory_space<vmem>>, vector<16x8xf32>
    %c0_2 = arith.constant 0 : index
    %c0_3 = arith.constant 0 : index
    %4 = vector.load %arg4[%c0_2, %c0_3] : memref<8x128xf32, #tpu.memory_space<vmem>>, vector<8x128xf32>
    %cst = arith.constant dense<0.000000e+00> : vector<16x128xf32>
    %5 = tpu.matmul %3, %4, %cst {dimension_numbers = #tpu.dot_dimension_numbers<[1], [0], [0], [1], [0, 0, 1, 1], [], []>} : vector<16x8xf32>, vector<8x128xf32>, vector<16x128xf32> -> vector<16x128xf32>
    %c0_4 = arith.constant 0 : index
    %c0_5 = arith.constant 0 : index
    %6 = vector.load %arg5[%c0_4, %c0_5] : memref<1x128xf32, #tpu.memory_space<vmem>>, vector<1x128xf32>
    %7 = vector.broadcast %6 : vector<1x128xf32> to vector<16x128xf32>
    %8 = arith.addf %5, %7 : vector<16x128xf32>
    %cst_6 = arith.constant 0.000000e+00 : f32
    %9 = vector.broadcast %cst_6 : f32 to vector<16x128xf32>
    %10 = arith.maximumf %8, %9 : vector<16x128xf32>
    %c0_7 = arith.constant 0 : index
    %c0_8 = arith.constant 0 : index
    %11 = vector.load %arg9[%c0_7, %c0_8] : memref<16x128xf32, #tpu.memory_space<vmem>>, vector<16x128xf32>
    %c0_9 = arith.constant 0 : index
    %c0_10 = arith.constant 0 : index
    %12 = vector.load %arg2[%c0_9, %c0_10] : memref<16x16xf32, #tpu.memory_space<vmem>>, vector<16x16xf32>
    %cst_11 = arith.constant dense<0.000000e+00> : vector<16x128xf32>
    %13 = tpu.matmul %12, %10, %cst_11 {dimension_numbers = #tpu.dot_dimension_numbers<[1], [0], [0], [1], [0, 0, 1, 1], [], []>} : vector<16x16xf32>, vector<16x128xf32>, vector<16x128xf32> -> vector<16x128xf32>
    %14 = arith.addf %11, %13 : vector<16x128xf32>
    %c0_12 = arith.constant 0 : index
    %c0_13 = arith.constant 0 : index
    %15 = vector.load %arg9[%c0_12, %c0_13] : memref<16x128xf32, #tpu.memory_space<vmem>>, vector<16x128xf32>
    tpu.vector_store %arg9[%c0_12, %c0_13], %14 {strides = array<i32>} : memref<16x128xf32, #tpu.memory_space<vmem>>, vector<16x128xf32>,
    %c0_i32_14 = arith.constant 0 : i32
    %16 = arith.cmpi eq, %arg1, %c0_i32_14 : i32
    %17 = arith.extui %16 : i1 to i32
    %c0_i32_15 = arith.constant 0 : i32
    %18 = arith.cmpi ne, %17, %c0_i32_15 : i32
    scf.if %18 {
      %c0_16 = arith.constant 0 : index
      %c0_17 = arith.constant 0 : index
      %19 = vector.load %arg9[%c0_16, %c0_17] : memref<16x128xf32, #tpu.memory_space<vmem>>, vector<16x128xf32>
      %c0_18 = arith.constant 0 : index
      %c0_19 = arith.constant 0 : index
      %20 = vector.load %arg6[%c0_18, %c0_19] : memref<128x128xf32, #tpu.memory_space<vmem>>, vector<128x128xf32>
      %cst_20 = arith.constant dense<0.000000e+00> : vector<16x128xf32>
      %21 = tpu.matmul %19, %20, %cst_20 {dimension_numbers = #tpu.dot_dimension_numbers<[1], [0], [0], [1], [0, 0, 1, 1], [], []>} : vector<16x128xf32>, vector<128x128xf32>, vector<16x128xf32> -> vector<16x128xf32>
      %c0_21 = arith.constant 0 : index
      %c0_22 = arith.constant 0 : index
      %22 = vector.load %arg7[%c0_21, %c0_22] : memref<1x128xf32, #tpu.memory_space<vmem>>, vector<1x128xf32>
      %23 = vector.broadcast %22 : vector<1x128xf32> to vector<16x128xf32>
      %24 = arith.addf %21, %23 : vector<16x128xf32>
      %cst_23 = arith.constant 0.000000e+00 : f32
      %25 = vector.broadcast %cst_23 : f32 to vector<16x128xf32>
      %26 = arith.maximumf %24, %25 : vector<16x128xf32>
      %c0_24 = arith.constant 0 : index
      %c0_25 = arith.constant 0 : index
      %27 = vector.load %arg8[%c0_24, %c0_25] : memref<16x128xf32, #tpu.memory_space<vmem>>, vector<16x128xf32>
      tpu.vector_store %arg8[%c0_24, %c0_25], %26 {strides = array<i32>} : memref<16x128xf32, #tpu.memory_space<vmem>>, vector<16x128xf32>,
    } else {
    }
    return
  }
  func.func @transform_0(%arg0: i32, %arg1: i32) -> (i32, i32) {
    %c0_i32 = arith.constant 0 : i32
    return %arg0, %arg1 : i32, i32
  }
  func.func @transform_1(%arg0: i32, %arg1: i32) -> (i32, i32) {
    %c0_i32 = arith.constant 0 : i32
    %c0_i32_0 = arith.constant 0 : i32
    return %arg1, %c0_i32 : i32, i32
  }
  func.func @transform_2(%arg0: i32, %arg1: i32) -> (i32, i32) {
    %c0_i32 = arith.constant 0 : i32
    %c0_i32_0 = arith.constant 0 : i32
    %c0_i32_1 = arith.constant 0 : i32
    return %c0_i32, %c0_i32_0 : i32, i32
  }
  func.func @transform_3(%arg0: i32, %arg1: i32) -> (i32, i32) {
    %c0_i32 = arith.constant 0 : i32
    %c0_i32_0 = arith.constant 0 : i32
    %c0_i32_1 = arith.constant 0 : i32
    return %c0_i32, %c0_i32_0 : i32, i32
  }
  func.func @transform_4(%arg0: i32, %arg1: i32) -> (i32, i32) {
    %c0_i32 = arith.constant 0 : i32
    %c0_i32_0 = arith.constant 0 : i32
    %c0_i32_1 = arith.constant 0 : i32
    return %c0_i32, %c0_i32_0 : i32, i32
  }
  func.func @transform_5(%arg0: i32, %arg1: i32) -> (i32, i32) {
    %c0_i32 = arith.constant 0 : i32
    %c0_i32_0 = arith.constant 0 : i32
    %c0_i32_1 = arith.constant 0 : i32
    return %c0_i32, %c0_i32_0 : i32, i32
  }
  func.func @transform_6(%arg0: i32, %arg1: i32) -> (i32, i32) {
    %c0_i32 = arith.constant 0 : i32
    %c0_i32_0 = arith.constant 0 : i32
    return %arg0, %c0_i32 : i32, i32
  }
}

</mosaic_0001>

<llo_original>
// kernel: tpu_custom_call.1
$region0: #{tpu_custom_call.1}
  #allocation0 [shape = 'u32[]', space=smem, size = 0x4, offset = 0x4, fixed_abs, tag = 'smem constant byte address 0x4 - core index']
  #allocation1 [shape = 'u32[72,128]{1,0:T(1,128)}', space=vmem, size = 0x9000, scoped, tag = 'internal scratch']
  #allocation2 [shape = 'f32[16,128]{1,0:T(8,128)}', space=vmem, size = 0x2000, scoped, tag = 'scratch operand']
  %s0 = inlined_call_operand.vmem [shape: f32[16,16], index: 0, kind: input, shape index: {}]
  %s1 = inlined_call_operand.vmem [shape: f32[16,8], index: 1, kind: input, shape index: {}]
  %s2 = inlined_call_operand.vmem [shape: f32[8,128], index: 2, kind: input, shape index: {}]
  %s3 = inlined_call_operand.vmem [shape: f32[1,128], index: 3, kind: input, shape index: {}]
  %s4 = inlined_call_operand.hbm [shape: f32[128,128], index: 4, kind: input, shape index: {}]
  %s5 = inlined_call_operand.vmem [shape: f32[1,128], index: 5, kind: input, shape index: {}]
  %s6 = inlined_call_operand.hbm [shape: f32[16,128], index: 6, kind: output, shape index: {}]
  %s7 = sld [smem:[#allocation0]]
  $region46: #{tpu_custom_call.1} parent=0
    _
  %s9 = ssub.s32 1, %s7
  %s10 = scalar_select 0, %s9, %s7
  $region1: #{tpu_custom_call.1} parent=0
    #allocation3 [shape = 'u8[65536]{0}', space=vmem, size = 0x10000, scoped, tag = 'input window, operand 4, single buffered']
    #allocation4 [shape = 's32[1]{0}', space=sflag, size = 0x4, scoped, tag = 'scoped memory for tpu_custom_call.1']
    #allocation5 [shape = 's32[1]{0}', space=sflag, size = 0x4, scoped, tag = 'scoped memory for tpu_custom_call.1']
    #allocation6 [shape = 'u8[8192]{0}', space=vmem, size = 0x2000, scoped, tag = 'output window, operand 0, single buffered']
    %11 = vsyncpa [#allocation4], 0
    %12 = vsyncpa [#allocation5], 0
    // Predicated region
    $region2: #{tpu_custom_call.1} parent=1 // pred_check
      _
    $region3: #{tpu_custom_call.1} parent=1 // pred_check_branch
      %14 = sbr.rel (0) target = $region5
    $region4: #{tpu_custom_call.1} parent=1 // pred_region
      _
    $region5: #{tpu_custom_call.1} parent=1 // pred_fallthru
      _
    // Predicated region
    $region6: #{tpu_custom_call.1} parent=1 // pred_check
      _
    $region7: #{tpu_custom_call.1} parent=1 // pred_check_branch
      %16 = sbr.rel (0) target = $region9
    $region8: #{tpu_custom_call.1} parent=1 // pred_region
      _
    $region9: #{tpu_custom_call.1} parent=1 // pred_fallthru
      _
    // Predicated region
    $region10: #{tpu_custom_call.1} parent=1 // pred_check
      _
    $region11: #{tpu_custom_call.1} parent=1 // pred_check_branch
      %18 = sbr.rel (0) target = $region13
    $region12: #{tpu_custom_call.1} parent=1 // pred_region
      _
    $region13: #{tpu_custom_call.1} parent=1 // pred_fallthru
      _
    // Predicated region
    $region14: #{tpu_custom_call.1} parent=1 // pred_check
      _
    $region15: #{tpu_custom_call.1} parent=1 // pred_check_branch
      %20 = sbr.rel (0) target = $region17
    $region16: #{tpu_custom_call.1} parent=1 // pred_region
      _
    $region17: #{tpu_custom_call.1} parent=1 // pred_fallthru
      _
    // Predicated region
    $region18: #{tpu_custom_call.1} parent=1 // pred_check
      _
    $region19: #{tpu_custom_call.1} parent=1 // pred_check_branch
      %22 = sbr.rel (0) target = $region21
    $region20: #{tpu_custom_call.1} parent=1 // pred_region
      %24 = vsyncadd [#allocation4], 0
      %s25 = sshll.u32 %s4, 4
      %s26 = int_to_ptr.hbm [resolvable:$true] %s25
      %s27 = sshll.u32 [#allocation3], 4
      %s28 = int_to_ptr.vmem [resolvable:$true] %s27
      %33 = dma.hbm_to_vmem [thread:$0]  %s26, 2048, %s28, [#allocation4], 128, 128, 8
    $region21: #{tpu_custom_call.1} parent=1 // pred_fallthru
      _
    // Predicated region
    $region22: #{tpu_custom_call.1} parent=1 // pred_check
      _
    $region23: #{tpu_custom_call.1} parent=1 // pred_check_branch
      %35 = sbr.rel (0) target = $region25
    $region24: #{tpu_custom_call.1} parent=1 // pred_region
      _
    $region25: #{tpu_custom_call.1} parent=1 // pred_fallthru
      _
    // Predicated region
    $region26: #{tpu_custom_call.1} parent=1 // pred_check
      _
    $region27: #{tpu_custom_call.1} parent=1 // pred_check_branch
      %37 = sbr.rel (0) target = $region29
    $region28: #{tpu_custom_call.1} parent=1 // pred_region
      %39 = dma.done [#allocation4], 2048
    $region29: #{tpu_custom_call.1} parent=1 // pred_fallthru
      _
    %p40 = scmp.eq.s32.totalorder 0, 0
    // Predicated region
    $region30: #{tpu_custom_call.1} parent=1 // pred_check
      %p41 = pneg %p40
    $region31: #{tpu_custom_call.1} parent=1 // pred_check_branch
      %43 = sbr.rel (%p41) target = $region33
    $region32: #{tpu_custom_call.1} parent=1 // pred_region
      %44 = vst [vmem:[#allocation2] sm:$0xff] 0.0
      %45 = vst [vmem:[#allocation2 + $0x8] sm:$0xff] 0.0
    $region33: #{tpu_custom_call.1} parent=1 // pred_fallthru
      _
    %v46 = vld [vmem:[%s1] sm:$0xff]
    %v47 = vld [vmem:[%s1 + $0x8] sm:$0xff]
    %v48 = vld [vmem:[%s2] sm:$0xff]
    %v49 = vld [vmem:[%s3] sm:$0x1]
    %v51 = vperm.slane %v49, 0
    %vm53 = vcmask 64512
    %v55 = vsel %vm53, %v46, 0
    %v58 = vsel %vm53, %v47, 0
    %60 = vmatpush.msra.mxu0 0.0
    %61 = vmatpush.msra.mxu0 0.0
    %62 = vmatpush.msra.mxu0 0.0
    %63 = vmatpush.msra.mxu0 0.0
    %64 = vmatpush.msra.mxu0 0.0
    %65 = vmatpush.msra.mxu0 0.0
    %66 = vmatpush.msra.mxu0 0.0
    %67 = vmatpush.msra.mxu0 0.0
    %68 = vmatpush.msra.mxu0 0.0
    %69 = vmatpush.msra.mxu0 0.0
    %70 = vmatpush.msra.mxu0 0.0
    %71 = vmatpush.msra.mxu0 0.0
    %72 = vmatpush.msra.mxu0 0.0
    %73 = vmatpush.msra.mxu0 0.0
    %74 = vmatpush.msra.mxu0 0.0
    %75 = vmatpush.msra.mxu0 %v48
    %76 = vmatmul.f32.gmra.mxu0 %v55
    %v77 = vpop.f32.mrf.mxu0
    %v78 = vadd.f32 %v51, %v77
    %79 = vmatmul.f32.gmra.mxu0 %v58
    %v80 = vpop.f32.mrf.mxu0
    %v81 = vadd.f32 %v51, %v80
    %82 = vdwg.mxu0
    %v83 = vmax.f32 %v78, 0.0
    %v84 = vmax.f32 %v81, 0.0
    %v85 = vld [vmem:[#allocation2] sm:$0xff]
    %v86 = vld [vmem:[#allocation2 + $0x8] sm:$0xff]
    %v87 = vld [vmem:[%s0] sm:$0xff]
    %v88 = vld [vmem:[%s0 + $0x8] sm:$0xff]
    %vm89 = vcmask 130048
    %v91 = vsel %vm89, %v87, 0
    %v94 = vsel %vm89, %v88, 0
    %96 = vmatpush.msra.mxu0 0.0
    %97 = vmatpush.msra.mxu0 0.0
    %98 = vmatpush.msra.mxu0 0.0
    %99 = vmatpush.msra.mxu0 0.0
    %100 = vmatpush.msra.mxu0 0.0
    %101 = vmatpush.msra.mxu0 0.0
    %102 = vmatpush.msra.mxu0 0.0
    %103 = vmatpush.msra.mxu0 0.0
    %104 = vmatpush.msra.mxu0 0.0
    %105 = vmatpush.msra.mxu0 0.0
    %106 = vmatpush.msra.mxu0 0.0
    %107 = vmatpush.msra.mxu0 0.0
    %108 = vmatpush.msra.mxu0 0.0
    %109 = vmatpush.msra.mxu0 0.0
    %110 = vmatpush.msra.mxu0 %v84
    %111 = vmatpush.msra.mxu0 %v83
    %112 = vmatmul.f32.gmra.mxu0 %v91
    %v113 = vpop.f32.mrf.mxu0
    %v114 = vadd.f32 0.0, %v113
    %115 = vmatmul.f32.gmra.mxu0 %v94
    %v116 = vpop.f32.mrf.mxu0
    %v117 = vadd.f32 0.0, %v116
    %118 = vdwg.mxu0
    %v119 = vadd.f32 %v85, %v114
    %v120 = vadd.f32 %v86, %v117
    %121 = vst [vmem:[#allocation2] sm:$0xff] %v119
    %122 = vst [vmem:[#allocation2 + $0x8] sm:$0xff] %v120
    // Predicated region
    $region34: #{tpu_custom_call.1} parent=1 // pred_check
      %p123 = pneg %p40
    $region35: #{tpu_custom_call.1} parent=1 // pred_check_branch
      %125 = sbr.rel (%p123) target = $region37
    $region36: #{tpu_custom_call.1} parent=1 // pred_region
      %v126 = vld [vmem:[#allocation2] sm:$0xff]
      %v127 = vld [vmem:[#allocation2 + $0x8] sm:$0xff]
      %v128 = vld [vmem:[#allocation3] sm:$0xff]
      %v129 = vld [vmem:[#allocation3 + $0x8] sm:$0xff]
      %v130 = vld [vmem:[#allocation3 + $0x10] sm:$0xff]
      %v131 = vld [vmem:[#allocation3 + $0x18] sm:$0xff]
      %v132 = vld [vmem:[#allocation3 + $0x20] sm:$0xff]
      %v133 = vld [vmem:[#allocation3 + $0x28] sm:$0xff]
      %v134 = vld [vmem:[#allocation3 + $0x30] sm:$0xff]
      %v135 = vld [vmem:[#allocation3 + $0x38] sm:$0xff]
      %v136 = vld [vmem:[#allocation3 + $0x40] sm:$0xff]
      %v137 = vld [vmem:[#allocation3 + $0x48] sm:$0xff]
      %v138 = vld [vmem:[#allocation3 + $0x50] sm:$0xff]
      %v139 = vld [vmem:[#allocation3 + $0x58] sm:$0xff]
      %v140 = vld [vmem:[#allocation3 + $0x60] sm:$0xff]
      %v141 = vld [vmem:[#allocation3 + $0x68] sm:$0xff]
      %v142 = vld [vmem:[#allocation3 + $0x70] sm:$0xff]
      %v143 = vld [vmem:[#allocation3 + $0x78] sm:$0xff]
      %v144 = vld [vmem:[%s5] sm:$0x1]
      %v146 = vperm.slane %v144, 0
      %148 = vmatpush.msra.mxu0 %v143
      %149 = vmatpush.msra.mxu0 %v142
      %150 = vmatpush.msra.mxu0 %v141
      %151 = vmatpush.msra.mxu0 %v140
      %152 = vmatpush.msra.mxu0 %v139
      %153 = vmatpush.msra.mxu0 %v138
      %154 = vmatpush.msra.mxu0 %v137
      %155 = vmatpush.msra.mxu0 %v136
      %156 = vmatpush.msra.mxu0 %v135
      %157 = vmatpush.msra.mxu0 %v134
      %158 = vmatpush.msra.mxu0 %v133
      %159 = vmatpush.msra.mxu0 %v132
      %160 = vmatpush.msra.mxu0 %v131
      %161 = vmatpush.msra.mxu0 %v130
      %162 = vmatpush.msra.mxu0 %v129
      %163 = vmatpush.msra.mxu0 %v128
      %164 = vmatmul.f32.gmra.mxu0 %v126
      %v165 = vpop.f32.mrf.mxu0
      %v166 = vadd.f32 %v146, %v165
      %167 = vmatmul.f32.gmra.mxu0 %v127
      %v168 = vpop.f32.mrf.mxu0
      %v169 = vadd.f32 %v146, %v168
      %170 = vdwg.mxu0
      %v171 = vmax.f32 %v166, 0.0
      %v172 = vmax.f32 %v169, 0.0
      %173 = vst [vmem:[#allocation6] sm:$0xff] %v171
      %174 = vst [vmem:[#allocation6 + $0x8] sm:$0xff] %v172
    $region37: #{tpu_custom_call.1} parent=1 // pred_fallthru
      _
    // Predicated region
    $region38: #{tpu_custom_call.1} parent=1 // pred_check
      _
    $region39: #{tpu_custom_call.1} parent=1 // pred_check_branch
      %176 = sbr.rel (0) target = $region41
    $region40: #{tpu_custom_call.1} parent=1 // pred_region
      %178 = vsyncadd [#allocation5], 0
      %s179 = sshll.u32 [#allocation6], 4
      %s180 = int_to_ptr.vmem [resolvable:$true] %s179
      %s181 = sshll.u32 %s6, 4
      %s182 = int_to_ptr.hbm [resolvable:$true] %s181
      %187 = dma.vmem_to_hbm [thread:$0]  %s180, 256, %s182, [#allocation5], 128, 128, 8
    $region41: #{tpu_custom_call.1} parent=1 // pred_fallthru
      _
    // Predicated region
    $region42: #{tpu_custom_call.1} parent=1 // pred_check
      _
    $region43: #{tpu_custom_call.1} parent=1 // pred_check_branch
      %189 = sbr.rel (0) target = $region45
    $region44: #{tpu_custom_call.1} parent=1 // pred_region
      %191 = dma.done [#allocation5], 256
    $region45: #{tpu_custom_call.1} parent=1 // pred_fallthru
      _
    %192 = vsyncpa [#allocation4], 1
    %193 = vsyncpa [#allocation5], 1

</llo_original>
